<compile_context>
chip_gen: v5e
topology: v5e:2x2
jax: 0.10.0
libtpu: 0.0.40
codegen_flags: <defaults>
</compile_context>

<pallas_src>
import numpy as np
import jax
import jax.numpy as jnp
from jax.experimental import pallas as pl
from jax.experimental.pallas import tpu as pltpu


# ---------------------------------------------------------------------------
# Parameter construction (plain JAX / numpy glue)
# ---------------------------------------------------------------------------
def get_positional_embeddings(sequence_length, d):
    """Vectorized equivalent of the PyTorch reference double loop."""
    i = np.arange(sequence_length, dtype=np.float64)[:, None]
    j = np.arange(d, dtype=np.float64)[None, :]
    even = np.sin(i / (10000.0 ** (j / d)))
    odd = np.cos(i / (10000.0 ** ((j - 1.0) / d)))
    result = np.where((np.arange(d)[None, :] % 2) == 0, even, odd)
    return jnp.asarray(result, dtype=jnp.float32)


def _round_up(x, m):
    return ((x + m - 1) // m) * m


def _vmem_capacity_bytes():
    try:
        return int(pltpu.get_tpu_info().vmem_capacity_bytes)
    except Exception:
        return 64 * 1024 * 1024  # conservative: v7x physical VMEM


def _grid_invariant_spec(block_shape, index_map):
    """Grid-invariant operand: request a single buffer (halves its VMEM)."""
    try:
        return pl.BlockSpec(block_shape, index_map, pipeline_mode=pl.Buffered(1))
    except Exception:  # API surface without pipeline_mode: harmless fallback
        return pl.BlockSpec(block_shape, index_map)


# ---------------------------------------------------------------------------
# Pallas kernel: one (i, k) grid step embeds Bb*T tokens against one V-chunk
# ---------------------------------------------------------------------------
def char_embed_kernel(ids_ref, tab_ref, pos_ref, out_ref):
    # ids_ref : (M, 1)   int32   token ids for this batch block (M = Bb*T)
    # tab_ref : (Vc, E)  float32 one vocab chunk of the embedding table
    # pos_ref : (M, E)   float32 positional embeddings, pre-tiled over Bb
    # out_ref : (M, E)   float32 flat lane-dense output block (accumulator)
    k = pl.program_id(1)
    M = ids_ref.shape[0]
    Vc = tab_ref.shape[0]

    @pl.when(k == 0)
    def _init():
        out_ref[...] = pos_ref[...]

    ids = ids_ref[...]                                              # (M, 1)
    col = jax.lax.broadcasted_iota(jnp.int32, (M, Vc), 1) + k * Vc
    one_hot = (col == ids).astype(tab_ref.dtype)                    # (M, Vc)

    # Default-precision (single-pass bf16) MXU matmul gathers the rows of
    # this vocab chunk; ids outside [0, V) match no chunk -> all-zero row.
    out_ref[...] += jnp.dot(one_hot, tab_ref[...],
                            preferred_element_type=jnp.float32)


# ---------------------------------------------------------------------------
# Wrapper
# ---------------------------------------------------------------------------
def character_embedding(ids, token_table, pos_table, *,
                        batch_block=None, vocab_chunk=None):
    """Forward pass: token_embed_tab(x) + positional_embeddings[:T]."""
    B, T = ids.shape
    V, E = token_table.shape
    block_size = pos_table.shape[0]
    if T > block_size:
        raise ValueError(f"sequence length T={T} exceeds block_size={block_size}")

    # ---- tiling choices --------------------------------------------------
    if batch_block is None:
        target_tokens = 512                      # fills MXU M on v5e/v6e/v7x
        batch_block = max(1, min(B, target_tokens // max(T, 1)))
        if B > 1:                                # >= 2 grid steps: v7x has 2 TCs
            batch_block = min(batch_block, pl.cdiv(B, 2))
    Bb = int(batch_block)
    while (Bb * T) % 8 != 0:                     # sublane-align the flat block
        Bb += 1
    M = Bb * T

    Vc = int(vocab_chunk) if vocab_chunk is not None else min(512, V)
    Vc = _round_up(Vc, 8)

    E_pad = _round_up(E, 128)                    # lane-dense output stores
    V_pad = _round_up(V, Vc)
    grid_b = pl.cdiv(B, Bb)
    B_pad = grid_b * Bb
    grid_v = V_pad // Vc

    # ---- operand prep (plain XLA, outside the kernel) ----------------------
    tab = jnp.pad(token_table.astype(jnp.float32),
                  ((0, V_pad - V), (0, E_pad - E)))
    pos = jnp.pad(pos_table[:T, :].astype(jnp.float32),
                  ((0, 0), (0, E_pad - E)))
    pos_block = jnp.tile(pos, (Bb, 1))                         # (M, E_pad)
    ids_flat = jnp.pad(ids.reshape(B * T).astype(jnp.int32),
                       (0, (B_pad - B) * T)).reshape(B_pad * T, 1)

    # ---- generation-aware VMEM budget --------------------------------------
    est = (2 * M * 128 * 4            # ids blocks (lane-padded), double-buffered
           + 2 * Vc * E_pad * 4       # table chunks, double-buffered
           + 1 * M * E_pad * 4        # pos (single-buffered, grid-invariant)
           + 2 * M * E_pad * 4        # output blocks
           + M * Vc * 4               # one-hot working set
           + (4 << 20))               # slack / internal scratch
    vmem_limit = int(min(max(est, 32 * 1024 * 1024),
                         int(0.85 * _vmem_capacity_bytes())))

    out_flat = pl.pallas_call(
        char_embed_kernel,
        out_shape=jax.ShapeDtypeStruct((B_pad * T, E_pad), jnp.float32),
        grid=(grid_b, grid_v),
        in_specs=[
            pl.BlockSpec((M, 1), lambda i, k: (i, 0)),           # ids block
            pl.BlockSpec((Vc, E_pad), lambda i, k: (k, 0)),      # table chunk
            _grid_invariant_spec((M, E_pad), lambda i, k: (0, 0)),  # pos emb
        ],
        out_specs=pl.BlockSpec((M, E_pad), lambda i, k: (i, 0)),
        compiler_params=pltpu.CompilerParams(
            dimension_semantics=("parallel", "arbitrary"),
            vmem_limit_bytes=vmem_limit,
        ),
    )(ids_flat, tab, pos_block)

    # Wrapper-side slice + reshape is free at the XLA level.
    return out_flat[:B * T, :E].reshape(B, T, E)


if __name__ == "__main__":
    # Small deterministic problem; n_embed=128 is already lane-dense, but the
    # wrapper would auto-pad any other value.
    vocab_size, block_size, n_embed = 128, 8, 128
    B, T = 2, 8

    key = jax.random.PRNGKey(0)
    k_tab, k_ids = jax.random.split(key)

    # nn.Embedding default init: N(0, 1)
    token_table = jax.random.normal(k_tab, (vocab_size, n_embed), dtype=jnp.float32)
    pos_table = get_positional_embeddings(block_size, n_embed)

    ids = jax.random.randint(k_ids, (B, T), 0, vocab_size, dtype=jnp.int32)

    out = character_embedding(ids, token_table, pos_table)
    out = jax.block_until_ready(out)

    # Pure-JAX reference.  The default-precision MXU path rounds the gathered
    # table values through bf16 (the one-hot operand is exact), so the
    # tolerance covers bf16 rounding of N(0,1) table entries (~0.4% relative).
    ref = token_table[ids] + pos_table[:T, :][None, :, :]
    assert out.shape == (B, T, n_embed)
    np.testing.assert_allclose(np.asarray(out), np.asarray(ref), rtol=2e-2, atol=3e-2)

    print("KERNEL_OK")
</pallas_src>

<mosaic_0001>
module attributes {stable_mosaic.version = 11 : i64} {
  func.func @char_embed_kernel(%arg0: i32, %arg1: i32, %arg2: memref<8x1xi32, #tpu.memory_space<vmem>>, %arg3: memref<128x128xf32, #tpu.memory_space<vmem>>, %arg4: memref<8x128xf32, #tpu.memory_space<vmem>>, %arg5: memref<8x128xf32, #tpu.memory_space<vmem>>) attributes {dimension_semantics = [#tpu.dimension_semantics<parallel>, #tpu.dimension_semantics<arbitrary>], iteration_bounds = array<i64: 2, 1>, scalar_prefetch = 0 : i64, scratch_operands = 0 : i64, tpu.core_type = #tpu.core_type<tc>, window_params = [{transform_indices = @transform_0, window_bounds = array<i64: 8, 1>}, {transform_indices = @transform_1, window_bounds = array<i64: 128, 128>}, {pipeline_mode = #tpu.pipeline_mode<synchronous>, transform_indices = @transform_2, window_bounds = array<i64: 8, 128>}, {transform_indices = @transform_3, window_bounds = array<i64: 8, 128>}]} {
    %c0_i32 = arith.constant 0 : i32
    %0 = arith.cmpi eq, %arg1, %c0_i32 : i32
    %1 = arith.extui %0 : i1 to i32
    %c0_i32_0 = arith.constant 0 : i32
    %2 = arith.cmpi ne, %1, %c0_i32_0 : i32
    scf.if %2 {
      %c0_8 = arith.constant 0 : index
      %c0_9 = arith.constant 0 : index
      %17 = vector.load %arg4[%c0_8, %c0_9] : memref<8x128xf32, #tpu.memory_space<vmem>>, vector<8x128xf32>
      %c0_10 = arith.constant 0 : index
      %c0_11 = arith.constant 0 : index
      %18 = vector.load %arg5[%c0_10, %c0_11] : memref<8x128xf32, #tpu.memory_space<vmem>>, vector<8x128xf32>
      tpu.vector_store %arg5[%c0_10, %c0_11], %17 {strides = array<i32>} : memref<8x128xf32, #tpu.memory_space<vmem>>, vector<8x128xf32>,
    } else {
    }
    %c0 = arith.constant 0 : index
    %c0_1 = arith.constant 0 : index
    %3 = vector.load %arg2[%c0, %c0_1] : memref<8x1xi32, #tpu.memory_space<vmem>>, vector<8x1xi32>
    %4 = tpu.iota {dimensions = array<i32: 1>} : vector<8x128xi32>
    %c128_i32 = arith.constant 128 : i32
    %5 = arith.muli %arg1, %c128_i32 : i32
    %6 = vector.broadcast %5 : i32 to vector<8x128xi32>
    %7 = arith.addi %4, %6 : vector<8x128xi32>
    %8 = vector.broadcast %3 : vector<8x1xi32> to vector<8x128xi32>
    %9 = arith.cmpi eq, %7, %8 : vector<8x128xi32>
    %10 = arith.extui %9 : vector<8x128xi1> to vector<8x128xi32>
    %11 = arith.sitofp %10 : vector<8x128xi32> to vector<8x128xf32>
    %c0_2 = arith.constant 0 : index
    %c0_3 = arith.constant 0 : index
    %12 = vector.load %arg5[%c0_2, %c0_3] : memref<8x128xf32, #tpu.memory_space<vmem>>, vector<8x128xf32>
    %c0_4 = arith.constant 0 : index
    %c0_5 = arith.constant 0 : index
    %13 = vector.load %arg3[%c0_4, %c0_5] : memref<128x128xf32, #tpu.memory_space<vmem>>, vector<128x128xf32>
    %cst = arith.constant dense<0.000000e+00> : vector<8x128xf32>
    %14 = tpu.matmul %11, %13, %cst {dimension_numbers = #tpu.dot_dimension_numbers<[1], [0], [0], [1], [0, 0, 1, 1], [], []>} : vector<8x128xf32>, vector<128x128xf32>, vector<8x128xf32> -> vector<8x128xf32>
    %15 = arith.addf %12, %14 : vector<8x128xf32>
    %c0_6 = arith.constant 0 : index
    %c0_7 = arith.constant 0 : index
    %16 = vector.load %arg5[%c0_6, %c0_7] : memref<8x128xf32, #tpu.memory_space<vmem>>, vector<8x128xf32>
    tpu.vector_store %arg5[%c0_6, %c0_7], %15 {strides = array<i32>} : memref<8x128xf32, #tpu.memory_space<vmem>>, vector<8x128xf32>,
    return
  }
  func.func @transform_0(%arg0: i32, %arg1: i32) -> (i32, i32) {
    %c0_i32 = arith.constant 0 : i32
    %c0_i32_0 = arith.constant 0 : i32
    return %arg0, %c0_i32 : i32, i32
  }
  func.func @transform_1(%arg0: i32, %arg1: i32) -> (i32, i32) {
    %c0_i32 = arith.constant 0 : i32
    %c0_i32_0 = arith.constant 0 : i32
    return %arg1, %c0_i32 : i32, i32
  }
  func.func @transform_2(%arg0: i32, %arg1: i32) -> (i32, i32) {
    %c0_i32 = arith.constant 0 : i32
    %c0_i32_0 = arith.constant 0 : i32
    %c0_i32_1 = arith.constant 0 : i32
    return %c0_i32, %c0_i32_0 : i32, i32
  }
  func.func @transform_3(%arg0: i32, %arg1: i32) -> (i32, i32) {
    %c0_i32 = arith.constant 0 : i32
    %c0_i32_0 = arith.constant 0 : i32
    return %arg0, %c0_i32 : i32, i32
  }
}

</mosaic_0001>

<llo_original>
// kernel: tpu_custom_call.1
$region0: #{tpu_custom_call.1}
  #allocation0 [shape = 'u32[]', space=smem, size = 0x4, offset = 0x4, fixed_abs, tag = 'smem constant byte address 0x4 - core index']
  #allocation1 [shape = 'u32[72,128]{1,0:T(1,128)}', space=vmem, size = 0x9000, scoped, tag = 'internal scratch']
  %s0 = inlined_call_operand.vmem [shape: s32[16,1], index: 0, kind: input, shape index: {}]
  %s1 = inlined_call_operand.hbm [shape: f32[128,128], index: 1, kind: input, shape index: {}]
  %s2 = inlined_call_operand.vmem [shape: f32[8,128], index: 2, kind: input, shape index: {}]
  %s3 = inlined_call_operand.hbm [shape: f32[16,128], index: 3, kind: output, shape index: {}]
  %s4 = sld [smem:[#allocation0]]
  $region53: #{tpu_custom_call.1} parent=0
    _
  %s6 = ssub.s32 1, %s4
  %s7 = scalar_select 0, %s6, %s4
  $region1: #{tpu_custom_call.1} parent=0
    #allocation2 [shape = 'u8[65536]{0}', space=vmem, size = 0x10000, scoped, tag = 'input window, operand 1, single buffered']
    #allocation3 [shape = 's32[2]{0}', space=sflag, size = 0x8, scoped, tag = 'scoped memory for tpu_custom_call.1']
    #allocation4 [shape = 's32[2]{0}', space=sflag, size = 0x8, scoped, tag = 'scoped memory for tpu_custom_call.1']
    #allocation5 [shape = 'u8[8192]{0}', space=vmem, size = 0x2000, scoped, tag = 'output window, operand 0']
    %8 = vsyncpa [#allocation3], 0
    %9 = vsyncpa [#allocation4], 0
    %s10 = scalar_lea.sflag [#allocation4], 1
    %11 = vsyncpa %s10, 0
    loop: start=0, step=1, limit=4
    $region2: #{tpu_custom_call.1} parent=1 // loop_pre_header
      _
    $region3: #{tpu_custom_call.1} parent=1 // loop_header
      %s13 = sphi 0, %s17
      %p14 = scmp.ge.s32.totalorder %s13, 4
      %s20 = sphi 0, %s32
      %s21 = sphi 0, %s28
      %s22 = sphi 0, %s20
      %s23 = sphi 0, %s21
      %s24 = sphi 0, %s22
      %s25 = sphi 0, %s23
      %s35 = sphi 0, %s37
      %s38 = sphi 0, %s35
      %s39 = sphi 0, %s38
      %s55 = sphi 0, %s39
      %s61 = sphi 0, %s63
      %s64 = sphi 0, %s61
      %s65 = sphi 0, %s64
      %s81 = sphi 0, %s65
      %s85 = sphi 0, %s85
      %s87 = sphi 0, %s85
      %s88 = sphi 0, %s87
      %s102 = sphi 0, %s88
      %s108 = sphi 0, %s110
      %s111 = sphi 0, %s108
      %s112 = sphi 0, %s111
      %s128 = sphi 0, %s112
    $region4: #{tpu_custom_call.1} parent=1 // loop_header_branch
      %16 = sbr.rel (%p14) target = $region8
    $region5: #{tpu_custom_call.1} parent=1 // loop_body
      %s18 = ssub.s32 %s13, 1
      %s19 = ssub.s32 %s13, 2
      %s26 = sadd.s32 1, %s21
      %p27 = scmp.ge.s32.totalorder %s26, 1
      %s28 = scalar_select %p27, 0, %s26
      %s29 = sadd.s32 1, %s20
      %s30 = scalar_select %p27, %s29, %s20
      %p31 = scmp.ge.s32.totalorder %s30, 2
      %s32 = scalar_select %p31, 0, %s30
      %s33 = ssub.s32 %s20, %s32
      %p34 = scmp.eq.s32.totalorder %s33, 0
      %s36 = sadd.s32 %s35, 1
      %s37 = scalar_select %p34, %s35, %s36
      %p40 = pneg %p34
      %p41 = scmp.eq.s32.totalorder %s13, 1
      %p42 = por %p40, %p41
      %p43 = scmp.ne.s32.totalorder %s35, %s38
      %p44 = scmp.eq.s32.totalorder %s13, 0
      %p45 = por %p43, %p44
      %p46 = scmp.ne.s32.totalorder %s35, %s38
      %p47 = scmp.eq.s32.totalorder %s18, 1
      %p48 = por %p46, %p47
      %p49 = scmp.ne.s32.totalorder %s38, %s39
      %p50 = scmp.eq.s32.totalorder %s18, 0
      %p51 = por %p49, %p50
      %p52 = scmp.ne.s32.totalorder %s38, %s39
      %p53 = scmp.eq.s32.totalorder %s19, 1
      %p54 = por %p52, %p53
      %p56 = scmp.ne.s32.totalorder %s39, %s55
      %p57 = scmp.eq.s32.totalorder %s19, 0
      %p58 = por %p56, %p57
      %s59 = ssub.s32 %s21, %s28
      %p60 = scmp.eq.s32.totalorder %s59, 0
      %s62 = sadd.s32 %s61, 1
      %s63 = scalar_select %p60, %s61, %s62
      %p66 = pneg %p60
      %p67 = scmp.eq.s32.totalorder %s13, 1
      %p68 = por %p66, %p67
      %p69 = scmp.ne.s32.totalorder %s61, %s64
      %p70 = scmp.eq.s32.totalorder %s13, 0
      %p71 = por %p69, %p70
      %p72 = scmp.ne.s32.totalorder %s61, %s64
      %p73 = scmp.eq.s32.totalorder %s18, 1
      %p74 = por %p72, %p73
      %p75 = scmp.ne.s32.totalorder %s64, %s65
      %p76 = scmp.eq.s32.totalorder %s18, 0
      %p77 = por %p75, %p76
      %p78 = scmp.ne.s32.totalorder %s64, %s65
      %p79 = scmp.eq.s32.totalorder %s19, 1
      %p80 = por %p78, %p79
      %p82 = scmp.ne.s32.totalorder %s65, %s81
      %p83 = scmp.eq.s32.totalorder %s19, 0
      %p84 = por %p82, %p83
      %s86 = sadd.s32 %s85, 1
      %p89 = scmp.eq.s32.totalorder %s13, 1
      %p90 = scmp.ne.s32.totalorder %s85, %s87
      %p91 = scmp.eq.s32.totalorder %s13, 0
      %p92 = por %p90, %p91
      %p93 = scmp.ne.s32.totalorder %s85, %s87
      %p94 = scmp.eq.s32.totalorder %s18, 1
      %p95 = por %p93, %p94
      %p96 = scmp.ne.s32.totalorder %s87, %s88
      %p97 = scmp.eq.s32.totalorder %s18, 0
      %p98 = por %p96, %p97
      %p99 = scmp.ne.s32.totalorder %s87, %s88
      %p100 = scmp.eq.s32.totalorder %s19, 1
      %p101 = por %p99, %p100
      %p103 = scmp.ne.s32.totalorder %s88, %s102
      %p104 = scmp.eq.s32.totalorder %s19, 0
      %p105 = por %p103, %p104
      %s106 = ssub.s32 %s20, %s32
      %p107 = scmp.eq.s32.totalorder %s106, 0
      %s109 = sadd.s32 %s108, 1
      %s110 = scalar_select %p107, %s108, %s109
      %p113 = pneg %p107
      %p114 = scmp.eq.s32.totalorder %s13, 1
      %p115 = por %p113, %p114
      %p116 = scmp.ne.s32.totalorder %s108, %s111
      %p117 = scmp.eq.s32.totalorder %s13, 0
      %p118 = por %p116, %p117
      %p119 = scmp.ne.s32.totalorder %s108, %s111
      %p120 = scmp.eq.s32.totalorder %s18, 1
      %p121 = por %p119, %p120
      %p122 = scmp.ne.s32.totalorder %s111, %s112
      %p123 = scmp.eq.s32.totalorder %s18, 0
      %p124 = por %p122, %p123
      %p125 = scmp.ne.s32.totalorder %s111, %s112
      %p126 = scmp.eq.s32.totalorder %s19, 1
      %p127 = por %p125, %p126
      %p129 = scmp.ne.s32.totalorder %s112, %s128
      %p130 = scmp.eq.s32.totalorder %s19, 0
      %p131 = por %p129, %p130
      %p132 = scmp.le.s32.totalorder 1, %s13
      %p133 = scmp.lt.s32.totalorder %s13, 3
      %p134 = pnand %p132, %p133
      %p135 = pneg %p134
      // Predicated region
      $region9: #{tpu_custom_call.1} parent=5 // pred_check
        _
      $region10: #{tpu_custom_call.1} parent=5 // pred_check_branch
        %137 = sbr.rel (%p134) target = $region12
      $region11: #{tpu_custom_call.1} parent=5 // pred_region
        %s138 = ssub.s32 %s13, 1
        // Predicated region
        $region13: #{tpu_custom_call.1} parent=11 // pred_check
          %p139 = pneg %p77
        $region14: #{tpu_custom_call.1} parent=11 // pred_check_branch
          %141 = sbr.rel (%p139) target = $region16
        $region15: #{tpu_custom_call.1} parent=11 // pred_region
          %s142 = smul.u32 16, %s23
          %144 = vsyncadd [#allocation3], 0
          %s145 = smul.addr %s142, 8
          %s146 = scalar_lea.hbm %s1, %s145
          %s147 = sshll.u32 %s146, 4
          %s148 = int_to_ptr.hbm [resolvable:$true] %s147
          %s149 = sshll.u32 [#allocation2], 4
          %s150 = int_to_ptr.vmem [resolvable:$true] %s149
          %155 = dma.hbm_to_vmem [thread:$0]  %s148, 2048, %s150, [#allocation3], 128, 128, 8
        $region16: #{tpu_custom_call.1} parent=11 // pred_fallthru
          _
        // Predicated region
        $region17: #{tpu_custom_call.1} parent=11 // pred_check
          %p156 = pneg %p98
        $region18: #{tpu_custom_call.1} parent=11 // pred_check_branch
          %158 = sbr.rel (%p156) target = $region20
        $region19: #{tpu_custom_call.1} parent=11 // pred_region
          _
        $region20: #{tpu_custom_call.1} parent=11 // pred_fallthru
          _
      $region12: #{tpu_custom_call.1} parent=5 // pred_fallthru
        _
      %p159 = scmp.lt.s32.totalorder %s13, 2
      // Predicated region
      $region21: #{tpu_custom_call.1} parent=5 // pred_check
        %p160 = pneg %p159
      $region22: #{tpu_custom_call.1} parent=5 // pred_check_branch
        %162 = sbr.rel (%p160) target = $region24
      $region23: #{tpu_custom_call.1} parent=5 // pred_region
        // Predicated region
        $region25: #{tpu_custom_call.1} parent=23 // pred_check
          %p163 = pneg %p45
        $region26: #{tpu_custom_call.1} parent=23 // pred_check_branch
          %165 = sbr.rel (%p163) target = $region28
        $region27: #{tpu_custom_call.1} parent=23 // pred_region
          %p166 = scmp.lt.s32.totalorder %s20, 1
          %s167 = scalar_select %p166, %s20, 1
          %s168 = smul.addr %s167, 8
          %s169 = scalar_lea.vmem %s0, %s168
        $region28: #{tpu_custom_call.1} parent=23 // pred_fallthru
          _
      $region24: #{tpu_custom_call.1} parent=5 // pred_fallthru
        _
      %p170 = scmp.le.s32.totalorder 1, %s13
      %p171 = scmp.lt.s32.totalorder %s13, 3
      %p172 = pnand %p170, %p171
      %p173 = pneg %p172
      // Predicated region
      $region29: #{tpu_custom_call.1} parent=5 // pred_check
        _
      $region30: #{tpu_custom_call.1} parent=5 // pred_check_branch
        %175 = sbr.rel (%p172) target = $region32
      $region31: #{tpu_custom_call.1} parent=5 // pred_region
        %s176 = ssub.s32 %s13, 1
        // Predicated region
        $region33: #{tpu_custom_call.1} parent=31 // pred_check
          %p177 = pneg %p77
        $region34: #{tpu_custom_call.1} parent=31 // pred_check_branch
          %179 = sbr.rel (%p177) target = $region36
        $region35: #{tpu_custom_call.1} parent=31 // pred_region
          %181 = dma.done [#allocation3], 2048
        $region36: #{tpu_custom_call.1} parent=31 // pred_fallthru
          _
        %p182 = scmp.lt.s32.totalorder %s22, 1
        %s183 = scalar_select %p182, %s22, 1
        %s184 = smul.addr %s183, 8
        %s185 = scalar_lea.vmem %s0, %s184
        %p186 = pneg %p51
        %p187 = pneg %p48
        %p188 = pneg %p77
        %p189 = pneg %p74
        %p190 = pneg %p98
        %p191 = pneg %p95
        %p192 = pneg %p124
        %p193 = pneg %p121
        %s194 = sand.u32 %s111, 1
        %s195 = scalar_lea.sflag [#allocation4], %s194
        %s196 = sand.u32 %s111, 1
        %s197 = smul.addr %s196, 8
        %s198 = scalar_lea.vmem [#allocation5], %s197
        %p199 = scmp.lt.s32.totalorder %s22, 1
        %s200 = scalar_select %p199, %s22, 1
        %s201 = smul.addr %s200, 8
        %s202 = scalar_lea.vmem %s0, %s201
        %s203 = smul.u32 16, %s23
        %p204 = scmp.eq.s32.totalorder %s23, 0
        // Predicated region
        $region37: #{tpu_custom_call.1} parent=31 // pred_check
          %p205 = pneg %p204
        $region38: #{tpu_custom_call.1} parent=31 // pred_check_branch
          %207 = sbr.rel (%p205) target = $region40
        $region39: #{tpu_custom_call.1} parent=31 // pred_region
          %v208 = vld [vmem:[%s2] sm:$0xff]
          %209 = vst [vmem:[%s198] sm:$0xff] %v208
        $region40: #{tpu_custom_call.1} parent=31 // pred_fallthru
          _
        %v210 = vld [vmem:[%s202] sm:$0xff]
        %v211 = vlaneseq
        %v212 = vand.u32 %v211, 127
        %s213 = smul.u32 %s23, 128
        %v214 = vstv %s213
        %v215 = vadd.s32 %v212, %v214
        %216 = vset.pattern.permute.xlu0 0
        %217 = vperm.xlu0 %216, %v210
        %v218 = vpop.permute.xlu0 %217
        %vm219 = vcmp.eq.s32.totalorder %v215, %v218
        %v220 = vsel %vm219, 1, 0
        %v221 = vcvt.s32.f32 %v220
        %v222 = vld [vmem:[%s198] sm:$0xff]
        %v223 = vld [vmem:[#allocation2] sm:$0xff]
        %v224 = vld [vmem:[#allocation2 + $0x8] sm:$0xff]
        %v225 = vld [vmem:[#allocation2 + $0x10] sm:$0xff]
        %v226 = vld [vmem:[#allocation2 + $0x18] sm:$0xff]
        %v227 = vld [vmem:[#allocation2 + $0x20] sm:$0xff]
        %v228 = vld [vmem:[#allocation2 + $0x28] sm:$0xff]
        %v229 = vld [vmem:[#allocation2 + $0x30] sm:$0xff]
        %v230 = vld [vmem:[#allocation2 + $0x38] sm:$0xff]
        %v231 = vld [vmem:[#allocation2 + $0x40] sm:$0xff]
        %v232 = vld [vmem:[#allocation2 + $0x48] sm:$0xff]
        %v233 = vld [vmem:[#allocation2 + $0x50] sm:$0xff]
        %v234 = vld [vmem:[#allocation2 + $0x58] sm:$0xff]
        %v235 = vld [vmem:[#allocation2 + $0x60] sm:$0xff]
        %v236 = vld [vmem:[#allocation2 + $0x68] sm:$0xff]
        %v237 = vld [vmem:[#allocation2 + $0x70] sm:$0xff]
        %v238 = vld [vmem:[#allocation2 + $0x78] sm:$0xff]
        %239 = vmatpush.msra.mxu0 %v238
        %240 = vmatpush.msra.mxu0 %v237
        %241 = vmatpush.msra.mxu0 %v236
        %242 = vmatpush.msra.mxu0 %v235
        %243 = vmatpush.msra.mxu0 %v234
        %244 = vmatpush.msra.mxu0 %v233
        %245 = vmatpush.msra.mxu0 %v232
        %246 = vmatpush.msra.mxu0 %v231
        %247 = vmatpush.msra.mxu0 %v230
        %248 = vmatpush.msra.mxu0 %v229
        %249 = vmatpush.msra.mxu0 %v228
        %250 = vmatpush.msra.mxu0 %v227
        %251 = vmatpush.msra.mxu0 %v226
        %252 = vmatpush.msra.mxu0 %v225
        %253 = vmatpush.msra.mxu0 %v224
        %254 = vmatpush.msra.mxu0 %v223
        %255 = vmatmul.f32.gmra.mxu0 %v221
        %v256 = vpop.f32.mrf.mxu0
        %v257 = vadd.f32 0.0, %v256
        %258 = vdwg.mxu0
        %v259 = vadd.f32 %v222, %v257
        %260 = vst [vmem:[%s198] sm:$0xff] %v259
        %s261 = sand.u32 %s111, 1
        %s262 = scalar_lea.sflag [#allocation4], %s261
        %s263 = sand.u32 %s111, 1
        %s264 = smul.addr %s263, 8
        %s265 = scalar_lea.vmem [#allocation5], %s264
        // Predicated region
        $region41: #{tpu_custom_call.1} parent=31 // pred_check
          %p266 = pneg %p121
        $region42: #{tpu_custom_call.1} parent=31 // pred_check_branch
          %268 = sbr.rel (%p266) target = $region44
        $region43: #{tpu_custom_call.1} parent=31 // pred_region
          %270 = vsyncadd %s262, 0
          %s271 = smul.addr %s22, 8
          %s272 = scalar_lea.hbm %s3, %s271
          %s274 = sshll.u32 %s265, 4
          %s275 = int_to_ptr.vmem [resolvable:$true] %s274
          %s276 = sshll.u32 %s272, 4
          %s277 = int_to_ptr.hbm [resolvable:$true] %s276
          %279 = dma.vmem_to_hbm [thread:$0]  %s275, 128, %s277, %s262
        $region44: #{tpu_custom_call.1} parent=31 // pred_fallthru
          _
      $region32: #{tpu_custom_call.1} parent=5 // pred_fallthru
        _
      %p280 = scmp.le.s32.totalorder 2, %s13
      // Predicated region
      $region45: #{tpu_custom_call.1} parent=5 // pred_check
        %p281 = pneg %p280
      $region46: #{tpu_custom_call.1} parent=5 // pred_check_branch
        %283 = sbr.rel (%p281) target = $region48
      $region47: #{tpu_custom_call.1} parent=5 // pred_region
        %s284 = ssub.s32 %s13, 2
        // Predicated region
        $region49: #{tpu_custom_call.1} parent=47 // pred_check
          %p285 = pneg %p127
        $region50: #{tpu_custom_call.1} parent=47 // pred_check_branch
          %287 = sbr.rel (%p285) target = $region52
        $region51: #{tpu_custom_call.1} parent=47 // pred_region
          %s288 = sand.u32 %s112, 1
          %s289 = scalar_lea.sflag [#allocation4], %s288
          %s290 = sand.u32 %s112, 1
          %s291 = smul.addr %s290, 8
          %s292 = scalar_lea.vmem [#allocation5], %s291
          %294 = dma.done %s289, 128
        $region52: #{tpu_custom_call.1} parent=47 // pred_fallthru
          _
      $region48: #{tpu_custom_call.1} parent=5 // pred_fallthru
        _
    $region6: #{tpu_custom_call.1} parent=1 // loop_footer
      %s17 = sadd.s32 1, %s13
    $region7: #{tpu_custom_call.1} parent=1 // loop_footer_branch
      %12 = sbr.rel target = $region3
    $region8: #{tpu_custom_call.1} parent=1 // loop_exit
      _
    %295 = vsyncpa [#allocation3], 1
    %s296 = scalar_lea.sflag [#allocation3], 1
    %297 = vsyncpa %s296, 1
    %298 = vsyncpa [#allocation4], 1
    %s299 = scalar_lea.sflag [#allocation4], 1
    %300 = vsyncpa %s299, 1

</llo_original>
